<compile_context>
chip_gen: v7x
topology: tpu7x:2x2x1
jax: 0.10.0
libtpu: 0.0.40
codegen_flags: <defaults>
</compile_context>

<pallas_src>
import math

import jax
import jax.numpy as jnp
from jax.experimental import pallas as pl
from jax.experimental.pallas import tpu as pltpu


# ----------------------------------------------------------------------------
# Pallas kernels
# ----------------------------------------------------------------------------
def _transport_resident_kernel(x_ref, tt_ref, b_ref, o_ref):
    """Main path: T^T[l] resident in VMEM, single contraction per B tile.

    x_ref : (tb, Dp)   tile of x[l]           (native dtype; bf16 -> MXU fast path)
    tt_ref: (Dp, Dp)   pre-transposed T^T[l]  (fetched once per l)
    b_ref : (1, Dp)    fused bias b = mu_t - mu_s @ T^T   (f32)
    o_ref : (tb, Dp)   output tile
    """
    y = jnp.dot(x_ref[...], tt_ref[...], preferred_element_type=jnp.float32)
    o_ref[...] = (y + b_ref[...]).astype(o_ref.dtype)


def _transport_ktiled_kernel(x_ref, tt_ref, b_ref, o_ref, acc_ref):
    """Fallback path for very large D: grid = (L, B-tiles, N-tiles, K-tiles).

    x_ref : (tb, tk), tt_ref: (tk, tn), b_ref: (1, tn) f32, o_ref: (tb, tn)
    acc_ref: VMEM (tb, tn) f32 accumulator, persistent across the K axis.
    """
    k = pl.program_id(3)

    @pl.when(k == 0)
    def _():
        acc_ref[...] = jnp.zeros_like(acc_ref)

    acc_ref[...] += jnp.dot(x_ref[...], tt_ref[...],
                            preferred_element_type=jnp.float32)

    @pl.when(k == pl.num_programs(3) - 1)
    def _():
        o_ref[...] = (acc_ref[...] + b_ref[...]).astype(o_ref.dtype)


# ----------------------------------------------------------------------------
# Wrapper
# ----------------------------------------------------------------------------
def _round_up(x, m):
    return (x + m - 1) // m * m


def _cdiv(a, b):
    return (a + b - 1) // b


def _pick_tile(size, candidates):
    for c in candidates:
        if size % c == 0:
            return c
    return size


def _vmem_capacity_bytes():
    try:
        info = pltpu.get_tpu_info()
        cap = getattr(info, "vmem_capacity_bytes", None)
        if cap:
            return int(cap)
    except Exception:
        pass
    return 64 << 20  # conservative default (v7x per-TensorCore)


def transport(x, T, mu_s, mu_t, *, force_ktiled=False):
    """Apply the Gaussian transport map  y = (x - mu_s) @ T^T + mu_t.

    Args:
      x:    [*lead, B, D]   samples from the source distribution(s)
      T:    [*lead, D, D]   per-operator transport matrices
      mu_s: [*lead, 1, D]   per-operator source means
      mu_t: [*lead, 1, D]   per-operator target means
    Returns:
      [*lead, B, D] transported samples (same dtype as x).
    """
    lead = x.shape[:-2]
    B, D = x.shape[-2], x.shape[-1]
    L = math.prod(lead) if lead else 1
    dtype = x.dtype
    itemsize = jnp.dtype(dtype).itemsize

    x = jnp.reshape(x, (L, B, D))
    T = jnp.reshape(T, (L, D, D))
    mu_s = jnp.reshape(mu_s, (L, 1, D))
    mu_t = jnp.reshape(mu_t, (L, 1, D))

    # Pre-transpose T once (XLA side, amortized) and fold both means into a
    # single f32 bias:  b = mu_t - mu_s @ T^T.
    T_t_f32 = jnp.swapaxes(T, -1, -2).astype(jnp.float32)          # (L, D, D)
    bias = (mu_t.astype(jnp.float32)
            - jnp.einsum("lod,lde->loe", mu_s.astype(jnp.float32), T_t_f32))
    T_t = T_t_f32.astype(dtype)   # x's dtype => MXU native mode (bf16 fast path)

    # Lane-dense padding along D only (and only when needed).  B is NEVER
    # padded: a cdiv grid with a masked ragged last tile handles it.
    Dp = _round_up(D, 128)
    if Dp != D:
        xp = jnp.pad(x, ((0, 0), (0, 0), (0, Dp - D)))
        ttp = jnp.pad(T_t, ((0, 0), (0, Dp - D), (0, Dp - D)))
        bp = jnp.pad(bias, ((0, 0), (0, 0), (0, Dp - D)))
    else:
        xp, ttp, bp = x, T_t, bias

    # B-tile selection: target 256 rows (MXU width on v6e/v7x), never collapse
    # to tiny tiles for awkward batch sizes.
    sub = {1: 32, 2: 16}.get(itemsize, 8)
    TB_TARGET = 256
    tb = B if B <= TB_TARGET else TB_TARGET
    nB = _cdiv(B, tb)
    # v7x has 2 TensorCores sharded over the parallel grid axes: make sure the
    # parallel extent is >= 2 when possible.
    if L * nB < 2 and B >= 2 * sub:
        tb = _round_up(_cdiv(B, 2), sub)
        nB = _cdiv(B, tb)

    # VMEM budget (per-TensorCore), generation-aware.
    vmem_cap = _vmem_capacity_bytes()
    budget = min(max(vmem_cap // 2 - (8 << 20), 16 << 20), 48 << 20)

    def fp_resident(tb_):
        # double-buffered x + out tiles, double-buffered resident T^T, f32 bias
        return 2 * itemsize * (Dp * Dp + 2 * tb_ * Dp) + 8 * Dp

    use_resident = not force_ktiled
    if use_resident and fp_resident(tb) > budget:
        # Shrink the B tile before giving up on a resident T^T.
        shrunk = None
        for cand in (128, 64):
            if cand < tb and fp_resident(cand) <= budget:
                shrunk = cand
                break
        if shrunk is not None:
            tb = shrunk
            nB = _cdiv(B, tb)
        else:
            use_resident = False

    flops = 2 * L * B * D * D
    bytes_accessed = (L * B * D * itemsize * 2      # x read + out write
                      + L * D * D * itemsize        # T^T
                      + L * D * 4)                  # bias
    cost = pl.CostEstimate(flops=flops, transcendentals=0,
                           bytes_accessed=int(bytes_accessed))

    if use_resident:
        vmem_limit = int(max(fp_resident(tb) + (8 << 20), 16 << 20))
        out = pl.pallas_call(
            _transport_resident_kernel,
            out_shape=jax.ShapeDtypeStruct((L, B, Dp), dtype),
            grid=(L, nB),
            in_specs=[
                pl.BlockSpec((None, tb, Dp), lambda l, i: (l, i, 0)),
                pl.BlockSpec((None, Dp, Dp), lambda l, i: (l, 0, 0)),
                pl.BlockSpec((None, 1, Dp), lambda l, i: (l, 0, 0)),
            ],
            out_specs=pl.BlockSpec((None, tb, Dp), lambda l, i: (l, i, 0)),
            compiler_params=pltpu.CompilerParams(
                dimension_semantics=("parallel", "parallel"),
                vmem_limit_bytes=vmem_limit,
            ),
            cost_estimate=cost,
        )(xp, ttp, bp)
    else:
        # Huge-D fallback: tile N and K as well, f32 accumulator across K.
        tn = _pick_tile(Dp, (512, 256, 128))
        tk = _pick_tile(Dp, (512, 256, 128))
        grid = (L, nB, Dp // tn, Dp // tk)
        fp = (2 * itemsize * (tb * tk + tk * tn + tb * tn)
              + 8 * tn + 4 * tb * tn)
        vmem_limit = int(max(fp + (8 << 20), 16 << 20))

        out = pl.pallas_call(
            _transport_ktiled_kernel,
            out_shape=jax.ShapeDtypeStruct((L, B, Dp), dtype),
            grid_spec=pltpu.PrefetchScalarGridSpec(
                num_scalar_prefetch=0,
                grid=grid,
                in_specs=[
                    pl.BlockSpec((None, tb, tk), lambda l, i, j, k: (l, i, k)),
                    pl.BlockSpec((None, tk, tn), lambda l, i, j, k: (l, k, j)),
                    pl.BlockSpec((None, 1, tn), lambda l, i, j, k: (l, 0, j)),
                ],
                out_specs=pl.BlockSpec((None, tb, tn),
                                       lambda l, i, j, k: (l, i, j)),
                scratch_shapes=[pltpu.VMEM((tb, tn), jnp.float32)],
            ),
            compiler_params=pltpu.CompilerParams(
                dimension_semantics=("parallel", "parallel", "parallel",
                                     "arbitrary"),
                vmem_limit_bytes=vmem_limit,
            ),
            cost_estimate=cost,
        )(xp, ttp, bp)

    if Dp != D:
        out = out[..., :D]
    return jnp.reshape(out, (*lead, B, D))


# ----------------------------------------------------------------------------
# Deterministic "model fitting" glue (plain JAX): build per-operator Gaussian
# source/target parameters and the Monge transport matrix.
# ----------------------------------------------------------------------------
def _spd(key, dim, scale=0.1):
    a = jax.random.normal(key, (dim, dim), dtype=jnp.float32) * scale
    return a @ a.T + jnp.eye(dim, dtype=jnp.float32)


def _sqrtm(m):
    w, v = jnp.linalg.eigh(m)
    w = jnp.clip(w, 0.0)
    return (v * jnp.sqrt(w)[None, :]) @ v.T


def _inv_sqrtm(m):
    w, v = jnp.linalg.eigh(m)
    w = jnp.clip(w, 1e-12)
    return (v * (1.0 / jnp.sqrt(w))[None, :]) @ v.T


def build_gaussian_transport_params(key, leading, dim):
    """Deterministically construct (T, mu_s, mu_t) per leading index."""
    Ts, mus, mut = [], [], []
    for l in range(leading):
        k = jax.random.fold_in(key, l)
        k1, k2, k3, k4 = jax.random.split(k, 4)
        cov_s = _spd(k1, dim)
        cov_t = _spd(k2, dim)
        s_half = _sqrtm(cov_s)
        s_inv_half = _inv_sqrtm(cov_s)
        mid = _sqrtm(s_half @ cov_t @ s_half)
        Tl = s_inv_half @ mid @ s_inv_half
        Ts.append(Tl)
        mus.append(jax.random.normal(k3, (1, dim), dtype=jnp.float32))
        mut.append(jax.random.normal(k4, (1, dim), dtype=jnp.float32))
    return (jnp.stack(Ts, axis=0),
            jnp.stack(mus, axis=0),
            jnp.stack(mut, axis=0))


if __name__ == "__main__":
    key = jax.random.PRNGKey(0)
    k1, k2, k3, k4, k5, k6 = jax.random.split(key, 6)

    # ---- (1) tiny, spec-consistent shapes: leading=(2,), B=8, dim=32 -------
    L, B, D = 2, 8, 32
    x = jax.random.normal(k1, (L, B, D), dtype=jnp.float32)
    T, mu_s, mu_t = build_gaussian_transport_params(k2, L, D)

    y = jax.block_until_ready(transport(x, T, mu_s, mu_t))
    y_ref = jnp.einsum("lbd,led->lbe", x - mu_s, T) + mu_t
    assert y.shape == (L, B, D)
    assert jnp.allclose(y, y_ref, atol=1e-3, rtol=1e-3)

    # ---- (2) exercise the K-tiled fallback path (forced), still small ------
    L2, B2, D2 = 2, 16, 256
    x2 = jax.random.normal(k3, (L2, B2, D2), dtype=jnp.float32)
    T2, mu_s2, mu_t2 = build_gaussian_transport_params(k4, L2, D2)

    y2 = jax.block_until_ready(transport(x2, T2, mu_s2, mu_t2,
                                         force_ktiled=True))
    y2_ref = jnp.einsum("lbd,led->lbe", x2 - mu_s2, T2) + mu_t2
    assert y2.shape == (L2, B2, D2)
    assert jnp.allclose(y2, y2_ref, atol=1e-3, rtol=1e-3)

    # ---- (3) ragged B tile + dual-TensorCore split (L=1, B=20) -------------
    L3, B3, D3 = 1, 20, 128
    x3 = jax.random.normal(k5, (L3, B3, D3), dtype=jnp.float32)
    T3, mu_s3, mu_t3 = build_gaussian_transport_params(k6, L3, D3)

    y3 = jax.block_until_ready(transport(x3, T3, mu_s3, mu_t3))
    y3_ref = jnp.einsum("lbd,led->lbe", x3 - mu_s3, T3) + mu_t3
    assert y3.shape == (L3, B3, D3)
    assert jnp.allclose(y3, y3_ref, atol=1e-3, rtol=1e-3)

    # ---- (4) bf16 fast path on the MXU (f32 accumulation + f32 bias) -------
    x4 = x3.astype(jnp.bfloat16)
    y4 = jax.block_until_ready(transport(x4, T3, mu_s3, mu_t3))
    assert y4.dtype == jnp.bfloat16
    assert jnp.allclose(y4.astype(jnp.float32), y3_ref, atol=0.5, rtol=0.1)

    # TODO(synk): `update`/`compute`/`fit_models`/`reset` are stateful
    # sufficient-statistic accumulation and distribution fitting (abstract in
    # the base class); they stay in plain-JAX glue above — only the
    # forward/transport hot path is a Pallas kernel.
    print("KERNEL_OK")
</pallas_src>

<mosaic_0001>
module attributes {stable_mosaic.version = 11 : i64} {
  func.func @_transport_resident_kernel(%arg0: i32, %arg1: i32, %arg2: memref<1x8x128xf32, #tpu.memory_space<vmem>>, %arg3: memref<1x128x128xf32, #tpu.memory_space<vmem>>, %arg4: memref<1x1x128xf32, #tpu.memory_space<vmem>>, %arg5: memref<1x8x128xf32, #tpu.memory_space<vmem>>) attributes {dimension_semantics = [#tpu.dimension_semantics<parallel>, #tpu.dimension_semantics<parallel>], iteration_bounds = array<i64: 2, 1>, scalar_prefetch = 0 : i64, scratch_operands = 0 : i64, tpu.core_type = #tpu.core_type<tc>, window_params = [{transform_indices = @transform_0, window_bounds = array<i64: 1, 8, 128>}, {transform_indices = @transform_1, window_bounds = array<i64: 1, 128, 128>}, {transform_indices = @transform_2, window_bounds = array<i64: 1, 1, 128>}, {transform_indices = @transform_3, window_bounds = array<i64: 1, 8, 128>}]} {
    %c0 = arith.constant 0 : index
    %c0_0 = arith.constant 0 : index
    %c0_1 = arith.constant 0 : index
    %0 = vector.load %arg2[%c0, %c0_0, %c0_1] : memref<1x8x128xf32, #tpu.memory_space<vmem>>, vector<1x8x128xf32>
    %1 = vector.shape_cast %0 : vector<1x8x128xf32> to vector<8x128xf32>
    %c0_2 = arith.constant 0 : index
    %c0_3 = arith.constant 0 : index
    %c0_4 = arith.constant 0 : index
    %2 = vector.load %arg3[%c0_2, %c0_3, %c0_4] : memref<1x128x128xf32, #tpu.memory_space<vmem>>, vector<1x128x128xf32>
    %3 = vector.shape_cast %2 : vector<1x128x128xf32> to vector<128x128xf32>
    %cst = arith.constant dense<0.000000e+00> : vector<8x128xf32>
    %4 = tpu.matmul %1, %3, %cst {dimension_numbers = #tpu.dot_dimension_numbers<[1], [0], [0], [1], [0, 0, 1, 1], [], []>} : vector<8x128xf32>, vector<128x128xf32>, vector<8x128xf32> -> vector<8x128xf32>
    %c0_5 = arith.constant 0 : index
    %c0_6 = arith.constant 0 : index
    %c0_7 = arith.constant 0 : index
    %5 = vector.load %arg4[%c0_5, %c0_6, %c0_7] : memref<1x1x128xf32, #tpu.memory_space<vmem>>, vector<1x1x128xf32>
    %6 = vector.shape_cast %5 : vector<1x1x128xf32> to vector<1x128xf32>
    %7 = vector.broadcast %6 : vector<1x128xf32> to vector<8x128xf32>
    %8 = arith.addf %4, %7 : vector<8x128xf32>
    %c0_8 = arith.constant 0 : index
    %c0_9 = arith.constant 0 : index
    %c0_10 = arith.constant 0 : index
    %9 = vector.load %arg5[%c0_8, %c0_9, %c0_10] : memref<1x8x128xf32, #tpu.memory_space<vmem>>, vector<1x8x128xf32>
    %10 = vector.shape_cast %9 : vector<1x8x128xf32> to vector<8x128xf32>
    %11 = vector.shape_cast %8 : vector<8x128xf32> to vector<1x8x128xf32>
    tpu.vector_store %arg5[%c0_8, %c0_9, %c0_10], %11 {strides = array<i32>} : memref<1x8x128xf32, #tpu.memory_space<vmem>>, vector<1x8x128xf32>,
    return
  }
  func.func @transform_0(%arg0: i32, %arg1: i32) -> (i32, i32, i32) {
    %c0_i32 = arith.constant 0 : i32
    %c0_i32_0 = arith.constant 0 : i32
    return %arg0, %arg1, %c0_i32 : i32, i32, i32
  }
  func.func @transform_1(%arg0: i32, %arg1: i32) -> (i32, i32, i32) {
    %c0_i32 = arith.constant 0 : i32
    %c0_i32_0 = arith.constant 0 : i32
    %c0_i32_1 = arith.constant 0 : i32
    return %arg0, %c0_i32, %c0_i32_0 : i32, i32, i32
  }
  func.func @transform_2(%arg0: i32, %arg1: i32) -> (i32, i32, i32) {
    %c0_i32 = arith.constant 0 : i32
    %c0_i32_0 = arith.constant 0 : i32
    %c0_i32_1 = arith.constant 0 : i32
    return %arg0, %c0_i32, %c0_i32_0 : i32, i32, i32
  }
  func.func @transform_3(%arg0: i32, %arg1: i32) -> (i32, i32, i32) {
    %c0_i32 = arith.constant 0 : i32
    %c0_i32_0 = arith.constant 0 : i32
    return %arg0, %arg1, %c0_i32 : i32, i32, i32
  }
}

</mosaic_0001>

<llo_original>
// kernel: tpu_custom_call.1
$region0: #{tpu_custom_call.1}
  #allocation0 [shape = 'u32[]', space=smem, size = 0x4, offset = 0x4, fixed_abs, tag = 'smem constant byte address 0x4 - core index']
  #allocation1 [shape = 'u32[144,128]{1,0:T(1,128)}', space=vmem, size = 0x12000, scoped, tag = 'internal scratch']
  %s0 = inlined_call_operand.hbm [shape: f32[2,8,128], index: 0, kind: input, shape index: {}]
  %s1 = inlined_call_operand.hbm [shape: f32[2,128,128], index: 1, kind: input, shape index: {}]
  %s2 = inlined_call_operand.vmem [shape: f32[2,1,128], index: 2, kind: input, shape index: {}]
  %s3 = inlined_call_operand.hbm [shape: f32[2,8,128], index: 3, kind: output, shape index: {}]
  %s4 = sld [smem:[#allocation0]]
  $region53: #{tpu_custom_call.1} parent=0
    _
  %s6 = ssub.s32 1, %s4
  %s7 = scalar_select 0, %s6, %s4
  $region1: #{tpu_custom_call.1} parent=0
    #allocation2 [shape = 'u8[8192]{0}', space=vmem, size = 0x2000, scoped, tag = 'input window, operand 0']
    #allocation3 [shape = 's32[2]{0}', space=sflag, size = 0x8, scoped, tag = 'scoped memory for tpu_custom_call.1']
    #allocation4 [shape = 's32[2]{0}', space=sflag, size = 0x8, scoped, tag = 'scoped memory for tpu_custom_call.1']
    #allocation5 [shape = 'u8[131072]{0}', space=vmem, size = 0x20000, scoped, tag = 'input window, operand 1']
    #allocation6 [shape = 's32[2]{0}', space=sflag, size = 0x8, scoped, tag = 'scoped memory for tpu_custom_call.1']
    #allocation7 [shape = 'u8[8192]{0}', space=vmem, size = 0x2000, scoped, tag = 'output window, operand 0']
    %8 = vsyncpa [#allocation3], 0
    %s9 = scalar_lea.sflag [#allocation3], 1
    %10 = vsyncpa %s9, 0
    %11 = vsyncpa [#allocation6], 0
    %s12 = scalar_lea.sflag [#allocation6], 1
    %13 = vsyncpa %s12, 0
    %14 = vsyncpa [#allocation4], 0
    %s15 = scalar_lea.sflag [#allocation4], 1
    %16 = vsyncpa %s15, 0
    loop: start=0, step=1, limit=4
    $region2: #{tpu_custom_call.1} parent=1 // loop_pre_header
      _
    $region3: #{tpu_custom_call.1} parent=1 // loop_header
      %s18 = sphi 0, %s22
      %p19 = scmp.ge.s32.totalorder %s18, 4
      %s25 = sphi 0, %s37
      %s26 = sphi 0, %s33
      %s27 = sphi 0, %s25
      %s28 = sphi 0, %s26
      %s29 = sphi 0, %s27
      %s30 = sphi 0, %s28
      %s42 = sphi 0, %s44
      %s45 = sphi 0, %s42
      %s46 = sphi 0, %s45
      %s62 = sphi 0, %s46
      %s68 = sphi 0, %s70
      %s71 = sphi 0, %s68
      %s72 = sphi 0, %s71
      %s88 = sphi 0, %s72
      %s94 = sphi 0, %s96
      %s97 = sphi 0, %s94
      %s98 = sphi 0, %s97
      %s114 = sphi 0, %s98
      %s122 = sphi 0, %s124
      %s125 = sphi 0, %s122
      %s126 = sphi 0, %s125
      %s142 = sphi 0, %s126
    $region4: #{tpu_custom_call.1} parent=1 // loop_header_branch
      %21 = sbr.rel (%p19) target = $region8
    $region5: #{tpu_custom_call.1} parent=1 // loop_body
      %s23 = ssub.s32 %s18, 1
      %s24 = ssub.s32 %s18, 2
      %s31 = sadd.s32 1, %s26
      %p32 = scmp.ge.s32.totalorder %s31, 1
      %s33 = scalar_select %p32, 0, %s31
      %s34 = sadd.s32 1, %s25
      %s35 = scalar_select %p32, %s34, %s25
      %p36 = scmp.ge.s32.totalorder %s35, 2
      %s37 = scalar_select %p36, 0, %s35
      %s38 = ssub.s32 %s25, %s37
      %s39 = ssub.s32 %s26, %s33
      %s40 = sor.u32 %s38, %s39
      %p41 = scmp.eq.s32.totalorder %s40, 0
      %s43 = sadd.s32 %s42, 1
      %s44 = scalar_select %p41, %s42, %s43
      %p47 = pneg %p41
      %p48 = scmp.eq.s32.totalorder %s18, 1
      %p49 = por %p47, %p48
      %p50 = scmp.ne.s32.totalorder %s42, %s45
      %p51 = scmp.eq.s32.totalorder %s18, 0
      %p52 = por %p50, %p51
      %p53 = scmp.ne.s32.totalorder %s42, %s45
      %p54 = scmp.eq.s32.totalorder %s23, 1
      %p55 = por %p53, %p54
      %p56 = scmp.ne.s32.totalorder %s45, %s46
      %p57 = scmp.eq.s32.totalorder %s23, 0
      %p58 = por %p56, %p57
      %p59 = scmp.ne.s32.totalorder %s45, %s46
      %p60 = scmp.eq.s32.totalorder %s24, 1
      %p61 = por %p59, %p60
      %p63 = scmp.ne.s32.totalorder %s46, %s62
      %p64 = scmp.eq.s32.totalorder %s24, 0
      %p65 = por %p63, %p64
      %s66 = ssub.s32 %s25, %s37
      %p67 = scmp.eq.s32.totalorder %s66, 0
      %s69 = sadd.s32 %s68, 1
      %s70 = scalar_select %p67, %s68, %s69
      %p73 = pneg %p67
      %p74 = scmp.eq.s32.totalorder %s18, 1
      %p75 = por %p73, %p74
      %p76 = scmp.ne.s32.totalorder %s68, %s71
      %p77 = scmp.eq.s32.totalorder %s18, 0
      %p78 = por %p76, %p77
      %p79 = scmp.ne.s32.totalorder %s68, %s71
      %p80 = scmp.eq.s32.totalorder %s23, 1
      %p81 = por %p79, %p80
      %p82 = scmp.ne.s32.totalorder %s71, %s72
      %p83 = scmp.eq.s32.totalorder %s23, 0
      %p84 = por %p82, %p83
      %p85 = scmp.ne.s32.totalorder %s71, %s72
      %p86 = scmp.eq.s32.totalorder %s24, 1
      %p87 = por %p85, %p86
      %p89 = scmp.ne.s32.totalorder %s72, %s88
      %p90 = scmp.eq.s32.totalorder %s24, 0
      %p91 = por %p89, %p90
      %s92 = ssub.s32 %s25, %s37
      %p93 = scmp.eq.s32.totalorder %s92, 0
      %s95 = sadd.s32 %s94, 1
      %s96 = scalar_select %p93, %s94, %s95
      %p99 = pneg %p93
      %p100 = scmp.eq.s32.totalorder %s18, 1
      %p101 = por %p99, %p100
      %p102 = scmp.ne.s32.totalorder %s94, %s97
      %p103 = scmp.eq.s32.totalorder %s18, 0
      %p104 = por %p102, %p103
      %p105 = scmp.ne.s32.totalorder %s94, %s97
      %p106 = scmp.eq.s32.totalorder %s23, 1
      %p107 = por %p105, %p106
      %p108 = scmp.ne.s32.totalorder %s97, %s98
      %p109 = scmp.eq.s32.totalorder %s23, 0
      %p110 = por %p108, %p109
      %p111 = scmp.ne.s32.totalorder %s97, %s98
      %p112 = scmp.eq.s32.totalorder %s24, 1
      %p113 = por %p111, %p112
      %p115 = scmp.ne.s32.totalorder %s98, %s114
      %p116 = scmp.eq.s32.totalorder %s24, 0
      %p117 = por %p115, %p116
      %s118 = ssub.s32 %s25, %s37
      %s119 = ssub.s32 %s26, %s33
      %s120 = sor.u32 %s118, %s119
      %p121 = scmp.eq.s32.totalorder %s120, 0
      %s123 = sadd.s32 %s122, 1
      %s124 = scalar_select %p121, %s122, %s123
      %p127 = pneg %p121
      %p128 = scmp.eq.s32.totalorder %s18, 1
      %p129 = por %p127, %p128
      %p130 = scmp.ne.s32.totalorder %s122, %s125
      %p131 = scmp.eq.s32.totalorder %s18, 0
      %p132 = por %p130, %p131
      %p133 = scmp.ne.s32.totalorder %s122, %s125
      %p134 = scmp.eq.s32.totalorder %s23, 1
      %p135 = por %p133, %p134
      %p136 = scmp.ne.s32.totalorder %s125, %s126
      %p137 = scmp.eq.s32.totalorder %s23, 0
      %p138 = por %p136, %p137
      %p139 = scmp.ne.s32.totalorder %s125, %s126
      %p140 = scmp.eq.s32.totalorder %s24, 1
      %p141 = por %p139, %p140
      %p143 = scmp.ne.s32.totalorder %s126, %s142
      %p144 = scmp.eq.s32.totalorder %s24, 0
      %p145 = por %p143, %p144
      %p146 = scmp.le.s32.totalorder 1, %s18
      %p147 = scmp.lt.s32.totalorder %s18, 3
      %p148 = pnand %p146, %p147
      %p149 = pneg %p148
      // Predicated region
      $region9: #{tpu_custom_call.1} parent=5 // pred_check
        _
      $region10: #{tpu_custom_call.1} parent=5 // pred_check_branch
        %151 = sbr.rel (%p148) target = $region12
      $region11: #{tpu_custom_call.1} parent=5 // pred_region
        %s152 = ssub.s32 %s18, 1
      $region12: #{tpu_custom_call.1} parent=5 // pred_fallthru
        _
      %p153 = scmp.lt.s32.totalorder %s18, 2
      // Predicated region
      $region13: #{tpu_custom_call.1} parent=5 // pred_check
        %p154 = pneg %p153
      $region14: #{tpu_custom_call.1} parent=5 // pred_check_branch
        %156 = sbr.rel (%p154) target = $region16
      $region15: #{tpu_custom_call.1} parent=5 // pred_region
        // Predicated region
        $region17: #{tpu_custom_call.1} parent=15 // pred_check
          %p157 = pneg %p52
        $region18: #{tpu_custom_call.1} parent=15 // pred_check_branch
          %159 = sbr.rel (%p157) target = $region20
        $region19: #{tpu_custom_call.1} parent=15 // pred_region
          %s160 = sand.u32 %s42, 1
          %s161 = scalar_lea.sflag [#allocation3], %s160
          %s162 = sand.u32 %s42, 1
          %s163 = smul.addr %s162, 8
          %s164 = scalar_lea.vmem [#allocation2], %s163
          %s166 = ssub.s32 128, 128
          %167 = vsyncadd %s161, %s166
          %s168 = sadd.s32 %s26, %s25
          %s169 = smul.addr %s168, 128
          %s170 = scalar_lea.hbm %s0, %s169
          %s172 = sshll.u32 %s164, 4
          %s173 = int_to_ptr.vmem [resolvable:$true] %s172
          %175 = dma.hbm_to_vmem [thread:$0]  %s170, 128, %s173, %s161
        $region20: #{tpu_custom_call.1} parent=15 // pred_fallthru
          _
        // Predicated region
        $region21: #{tpu_custom_call.1} parent=15 // pred_check
          %p176 = pneg %p78
        $region22: #{tpu_custom_call.1} parent=15 // pred_check_branch
          %178 = sbr.rel (%p176) target = $region24
        $region23: #{tpu_custom_call.1} parent=15 // pred_region
          %s179 = sand.u32 %s68, 1
          %s180 = scalar_lea.sflag [#allocation6], %s179
          %s181 = sand.u32 %s68, 1
          %s182 = smul.addr %s181, 128
          %s183 = scalar_lea.vmem [#allocation5], %s182
          %s185 = ssub.s32 2048, 2048
          %186 = vsyncadd %s180, %s185
          %s187 = smul.addr %s25, 16
          %s188 = smul.addr %s187, 128
          %s189 = scalar_lea.hbm %s1, %s188
          %s190 = sshll.u32 %s183, 4
          %s191 = int_to_ptr.vmem [resolvable:$true] %s190
          %196 = dma.hbm_to_vmem [thread:$0]  %s189, 2048, %s191, %s180, 128, 128, 8
        $region24: #{tpu_custom_call.1} parent=15 // pred_fallthru
          _
        // Predicated region
        $region25: #{tpu_custom_call.1} parent=15 // pred_check
          %p197 = pneg %p104
        $region26: #{tpu_custom_call.1} parent=15 // pred_check_branch
          %199 = sbr.rel (%p197) target = $region28
        $region27: #{tpu_custom_call.1} parent=15 // pred_region
          %p200 = scmp.lt.s32.totalorder %s25, 1
          %s201 = scalar_select %p200, %s25, 1
          %s202 = scalar_lea.vmem %s2, %s201
        $region28: #{tpu_custom_call.1} parent=15 // pred_fallthru
          _
      $region16: #{tpu_custom_call.1} parent=5 // pred_fallthru
        _
      %p203 = scmp.le.s32.totalorder 1, %s18
      %p204 = scmp.lt.s32.totalorder %s18, 3
      %p205 = pnand %p203, %p204
      %p206 = pneg %p205
      // Predicated region
      $region29: #{tpu_custom_call.1} parent=5 // pred_check
        _
      $region30: #{tpu_custom_call.1} parent=5 // pred_check_branch
        %208 = sbr.rel (%p205) target = $region32
      $region31: #{tpu_custom_call.1} parent=5 // pred_region
        %s209 = ssub.s32 %s18, 1
        %s210 = sand.u32 %s45, 1
        %s211 = scalar_lea.sflag [#allocation3], %s210
        %s212 = sand.u32 %s45, 1
        %s213 = smul.addr %s212, 8
        %s214 = scalar_lea.vmem [#allocation2], %s213
        // Predicated region
        $region33: #{tpu_custom_call.1} parent=31 // pred_check
          %p215 = pneg %p58
        $region34: #{tpu_custom_call.1} parent=31 // pred_check_branch
          %217 = sbr.rel (%p215) target = $region36
        $region35: #{tpu_custom_call.1} parent=31 // pred_region
          %218 = dma.done %s211, 128
        $region36: #{tpu_custom_call.1} parent=31 // pred_fallthru
          _
        %s219 = sand.u32 %s71, 1
        %s220 = scalar_lea.sflag [#allocation6], %s219
        %s221 = sand.u32 %s71, 1
        %s222 = smul.addr %s221, 128
        %s223 = scalar_lea.vmem [#allocation5], %s222
        // Predicated region
        $region37: #{tpu_custom_call.1} parent=31 // pred_check
          %p224 = pneg %p84
        $region38: #{tpu_custom_call.1} parent=31 // pred_check_branch
          %226 = sbr.rel (%p224) target = $region40
        $region39: #{tpu_custom_call.1} parent=31 // pred_region
          %227 = dma.done %s220, 2048
        $region40: #{tpu_custom_call.1} parent=31 // pred_fallthru
          _
        %s228 = sand.u32 %s45, 1
        %s229 = scalar_lea.sflag [#allocation3], %s228
        %s230 = sand.u32 %s45, 1
        %s231 = smul.addr %s230, 8
        %s232 = scalar_lea.vmem [#allocation2], %s231
        %p233 = pneg %p58
        %p234 = pneg %p55
        %s235 = sand.u32 %s71, 1
        %s236 = scalar_lea.sflag [#allocation6], %s235
        %s237 = sand.u32 %s71, 1
        %s238 = smul.addr %s237, 128
        %s239 = scalar_lea.vmem [#allocation5], %s238
        %p240 = pneg %p84
        %p241 = pneg %p81
        %p242 = scmp.lt.s32.totalorder %s27, 1
        %s243 = scalar_select %p242, %s27, 1
        %s244 = scalar_lea.vmem %s2, %s243
        %p245 = pneg %p110
        %p246 = pneg %p107
        %p247 = pneg %p138
        %p248 = pneg %p135
        %s249 = sand.u32 %s125, 1
        %s250 = scalar_lea.sflag [#allocation4], %s249
        %s251 = sand.u32 %s125, 1
        %s252 = smul.addr %s251, 8
        %s253 = scalar_lea.vmem [#allocation7], %s252
        %p254 = scmp.lt.s32.totalorder %s27, 1
        %s255 = scalar_select %p254, %s27, 1
        %s256 = scalar_lea.vmem %s2, %s255
        %v257 = vld [vmem:[%s214] sm:$0xff]
        %v258 = vld [vmem:[%s223] sm:$0xff]
        %v259 = vld [vmem:[%s223 + $0x8] sm:$0xff]
        %v260 = vld [vmem:[%s223 + $0x10] sm:$0xff]
        %v261 = vld [vmem:[%s223 + $0x18] sm:$0xff]
        %v262 = vld [vmem:[%s223 + $0x20] sm:$0xff]
        %v263 = vld [vmem:[%s223 + $0x28] sm:$0xff]
        %v264 = vld [vmem:[%s223 + $0x30] sm:$0xff]
        %v265 = vld [vmem:[%s223 + $0x38] sm:$0xff]
        %v266 = vld [vmem:[%s223 + $0x40] sm:$0xff]
        %v267 = vld [vmem:[%s223 + $0x48] sm:$0xff]
        %v268 = vld [vmem:[%s223 + $0x50] sm:$0xff]
        %v269 = vld [vmem:[%s223 + $0x58] sm:$0xff]
        %v270 = vld [vmem:[%s223 + $0x60] sm:$0xff]
        %v271 = vld [vmem:[%s223 + $0x68] sm:$0xff]
        %v272 = vld [vmem:[%s223 + $0x70] sm:$0xff]
        %v273 = vld [vmem:[%s223 + $0x78] sm:$0xff]
        %v274 = vld [vmem:[%s256] sm:$0x1]
        %v276 = vlaneseq
        %v277 = vshrl.u32 %v276, 7
        %v278 = vsub.s32 0, %v277
        %v279 = vrot.slane %v274, %v278
        %281 = vmatprep.subr.mxu0 0.0
        %282 = vmatpush1.msra.mxu0 %v258
        %283 = vmatprep.subr.mxu0 0.0
        %284 = vmatpush1.msra.mxu0 %v259
        %285 = vmatprep.subr.mxu0 0.0
        %286 = vmatpush1.msra.mxu0 %v260
        %287 = vmatprep.subr.mxu0 0.0
        %288 = vmatpush1.msra.mxu0 %v261
        %289 = vmatprep.subr.mxu0 0.0
        %290 = vmatpush1.msra.mxu0 %v262
        %291 = vmatprep.subr.mxu0 0.0
        %292 = vmatpush1.msra.mxu0 %v263
        %293 = vmatprep.subr.mxu0 0.0
        %294 = vmatpush1.msra.mxu0 %v264
        %295 = vmatprep.subr.mxu0 0.0
        %296 = vmatpush1.msra.mxu0 %v265
        %297 = vmatprep.subr.mxu0 0.0
        %298 = vmatpush1.msra.mxu0 %v266
        %299 = vmatprep.subr.mxu0 0.0
        %300 = vmatpush1.msra.mxu0 %v267
        %301 = vmatprep.subr.mxu0 0.0
        %302 = vmatpush1.msra.mxu0 %v268
        %303 = vmatprep.subr.mxu0 0.0
        %304 = vmatpush1.msra.mxu0 %v269
        %305 = vmatprep.subr.mxu0 0.0
        %306 = vmatpush1.msra.mxu0 %v270
        %307 = vmatprep.subr.mxu0 0.0
        %308 = vmatpush1.msra.mxu0 %v271
        %309 = vmatprep.subr.mxu0 0.0
        %310 = vmatpush1.msra.mxu0 %v272
        %311 = vmatprep.subr.mxu0 0.0
        %312 = vmatpush1.msra.mxu0 %v273
        %313 = vmatprep.subr.mxu0 0.0
        %314 = vmatpush1.msra.mxu0 0.0
        %315 = vmatprep.subr.mxu0 0.0
        %316 = vmatpush1.msra.mxu0 0.0
        %317 = vmatprep.subr.mxu0 0.0
        %318 = vmatpush1.msra.mxu0 0.0
        %319 = vmatprep.subr.mxu0 0.0
        %320 = vmatpush1.msra.mxu0 0.0
        %321 = vmatprep.subr.mxu0 0.0
        %322 = vmatpush1.msra.mxu0 0.0
        %323 = vmatprep.subr.mxu0 0.0
        %324 = vmatpush1.msra.mxu0 0.0
        %325 = vmatprep.subr.mxu0 0.0
        %326 = vmatpush1.msra.mxu0 0.0
        %327 = vmatprep.subr.mxu0 0.0
        %328 = vmatpush1.msra.mxu0 0.0
        %329 = vmatprep.subr.mxu0 0.0
        %330 = vmatpush1.msra.mxu0 0.0
        %331 = vmatprep.subr.mxu0 0.0
        %332 = vmatpush1.msra.mxu0 0.0
        %333 = vmatprep.subr.mxu0 0.0
        %334 = vmatpush1.msra.mxu0 0.0
        %335 = vmatprep.subr.mxu0 0.0
        %336 = vmatpush1.msra.mxu0 0.0
        %337 = vmatprep.subr.mxu0 0.0
        %338 = vmatpush1.msra.mxu0 0.0
        %339 = vmatprep.subr.mxu0 0.0
        %340 = vmatpush1.msra.mxu0 0.0
        %341 = vmatprep.subr.mxu0 0.0
        %342 = vmatpush1.msra.mxu0 0.0
        %343 = vmatprep.subr.mxu0 0.0
        %344 = vmatpush1.msra.mxu0 0.0
        %345 = vmatprep.mubr.f32.mxu0 0.0
        %346 = vmatmul.mubr.f32.gmra.mrb[0].mxu0 %v257
        %v347 = vpop.f32.mrb[0].mxu0
        %v348 = vadd.f32 %v279, %v347
        %v349 = vpop.f32.mrb[0].mxu0
        %350 = vdwg.mxu0
        %351 = vst [vmem:[%s253] sm:$0xff] %v348
        %s352 = sand.u32 %s125, 1
        %s353 = scalar_lea.sflag [#allocation4], %s352
        %s354 = sand.u32 %s125, 1
        %s355 = smul.addr %s354, 8
        %s356 = scalar_lea.vmem [#allocation7], %s355
        // Predicated region
        $region41: #{tpu_custom_call.1} parent=31 // pred_check
          %p357 = pneg %p135
        $region42: #{tpu_custom_call.1} parent=31 // pred_check_branch
          %359 = sbr.rel (%p357) target = $region44
        $region43: #{tpu_custom_call.1} parent=31 // pred_region
          %s361 = ssub.s32 128, 128
          %362 = vsyncadd %s353, %s361
          %s363 = sadd.s32 %s28, %s27
          %s364 = smul.addr %s363, 128
          %s365 = scalar_lea.hbm %s3, %s364
          %s367 = sshll.u32 %s356, 4
          %s368 = int_to_ptr.vmem [resolvable:$true] %s367
          %370 = dma.vmem_to_hbm [thread:$0]  %s368, 128, %s365, %s353
        $region44: #{tpu_custom_call.1} parent=31 // pred_fallthru
          _
      $region32: #{tpu_custom_call.1} parent=5 // pred_fallthru
        _
      %p371 = scmp.le.s32.totalorder 2, %s18
      // Predicated region
      $region45: #{tpu_custom_call.1} parent=5 // pred_check
        %p372 = pneg %p371
      $region46: #{tpu_custom_call.1} parent=5 // pred_check_branch
        %374 = sbr.rel (%p372) target = $region48
      $region47: #{tpu_custom_call.1} parent=5 // pred_region
        %s375 = ssub.s32 %s18, 2
        // Predicated region
        $region49: #{tpu_custom_call.1} parent=47 // pred_check
          %p376 = pneg %p141
        $region50: #{tpu_custom_call.1} parent=47 // pred_check_branch
          %378 = sbr.rel (%p376) target = $region52
        $region51: #{tpu_custom_call.1} parent=47 // pred_region
          %s379 = sand.u32 %s126, 1
          %s380 = scalar_lea.sflag [#allocation4], %s379
          %s381 = sand.u32 %s126, 1
          %s382 = smul.addr %s381, 8
          %s383 = scalar_lea.vmem [#allocation7], %s382
          %384 = dma.done %s380, 128
        $region52: #{tpu_custom_call.1} parent=47 // pred_fallthru
          _
      $region48: #{tpu_custom_call.1} parent=5 // pred_fallthru
        _
    $region6: #{tpu_custom_call.1} parent=1 // loop_footer
      %s22 = sadd.s32 1, %s18
    $region7: #{tpu_custom_call.1} parent=1 // loop_footer_branch
      %17 = sbr.rel target = $region3
    $region8: #{tpu_custom_call.1} parent=1 // loop_exit
      _
    %385 = vsyncpa [#allocation3], 1
    %s386 = scalar_lea.sflag [#allocation3], 1
    %387 = vsyncpa %s386, 1
    %388 = vsyncpa [#allocation6], 1
    %s389 = scalar_lea.sflag [#allocation6], 1
    %390 = vsyncpa %s389, 1
    %391 = vsyncpa [#allocation4], 1
    %s392 = scalar_lea.sflag [#allocation4], 1
    %393 = vsyncpa %s392, 1

</llo_original>
